<compile_context>
chip_gen: v5e
topology: v5e:2x2
jax: 0.10.0
libtpu: 0.0.40
codegen_flags: <defaults>
</compile_context>

<pallas_src>
import jax
import jax.numpy as jnp
from jax.experimental import pallas as pl
from jax.experimental.pallas import tpu as pltpu

_LANE = 128                              # TPU lane width (fast axis of a vreg)
_SMALL_BYTES = 64 * 1024                 # below this, skip the tiled pipeline
_TARGET_BLOCK_BYTES = 4 * 1024 * 1024    # ~4 MiB per block
_VMEM_LIMIT_BYTES = 32 * 1024 * 1024     # 2 in + 2 out blocks = 16 MiB + headroom


def _copy_kernel(x_ref, o_ref):
    # Full forward pass of Seq2SeqT5: the module defines no transformation,
    # so the kernel writes the input block back out unchanged.
    o_ref[...] = x_ref[...]


def _round_up(v: int, m: int) -> int:
    return ((v + m - 1) // m) * m


def _tiled_copy_2d(x2: jax.Array, nbytes: int) -> jax.Array:
    """Lane-dense tiled identity copy of a (rows, lanes) array."""
    rows, lanes = x2.shape
    itemsize = jnp.dtype(x2.dtype).itemsize

    # ~4 MiB blocks, rows a multiple of 8 (sublane).
    target_rows = max(8, (_TARGET_BLOCK_BYTES // (lanes * itemsize)) // 8 * 8)
    # Keep >= 2 grid steps so the "parallel" axis splits across v7x's 2 TCs.
    half_rows = _round_up(pl.cdiv(rows, 2), 8)
    tile_rows = min(target_rows, half_rows)
    grid = (pl.cdiv(rows, tile_rows),)

    cost = pl.CostEstimate(flops=0, transcendentals=0, bytes_accessed=2 * nbytes)
    return pl.pallas_call(
        _copy_kernel,
        out_shape=jax.ShapeDtypeStruct((rows, lanes), x2.dtype),
        grid=grid,
        in_specs=[pl.BlockSpec((tile_rows, lanes), lambda i: (i, 0))],
        out_specs=pl.BlockSpec((tile_rows, lanes), lambda i: (i, 0)),
        input_output_aliases={0: 0},
        compiler_params=pltpu.CompilerParams(
            dimension_semantics=("parallel",),      # megacore split on v7x
            vmem_limit_bytes=_VMEM_LIMIT_BYTES,
        ),
        cost_estimate=cost,
    )(x2)


def seq2seq_t5_forward(x: jax.Array) -> jax.Array:
    """Pallas implementation of Seq2SeqT5.forward (identity pass-through).

    x: activation tensor of any shape/dtype.  Returns an array identical to x.

    For zero HBM traffic callers should simply return `x`; when an explicit
    kernel is required, wrap this in jax.jit(..., donate_argnums=0) so the
    input/output aliasing avoids a defensive copy.
    """
    total = x.size
    itemsize = jnp.dtype(x.dtype).itemsize
    nbytes = total * itemsize

    # --- Tiny inputs: one full-array block, no grid, no pipeline overhead. ---
    if nbytes <= _SMALL_BYTES:
        cost = pl.CostEstimate(flops=0, transcendentals=0, bytes_accessed=2 * nbytes)
        return pl.pallas_call(
            _copy_kernel,
            out_shape=jax.ShapeDtypeStruct(x.shape, x.dtype),
            input_output_aliases={0: 0},
            cost_estimate=cost,
        )(x)

    # --- Lane-aligned: flatten to (rows, 128) -> unmasked full-lane stores. ---
    if total % _LANE == 0:
        rows = total // _LANE
        y2 = _tiled_copy_2d(x.reshape(rows, _LANE), nbytes)
        return y2.reshape(x.shape)

    # --- Large, lane-misaligned: pad to a lane multiple, never pull the whole
    # array into VMEM.  TODO(synk): the pad/slice costs one extra bounded pass
    # of HBM traffic; acceptable for this rare case.
    padded = _round_up(total, _LANE)
    xp = jnp.pad(x.reshape(-1), (0, padded - total))
    y2 = _tiled_copy_2d(xp.reshape(padded // _LANE, _LANE), padded * itemsize)
    return y2.reshape(-1)[:total].reshape(x.shape)


if __name__ == "__main__":
    key = jax.random.PRNGKey(0)
    k1, k2, k3 = jax.random.split(key, 3)

    # Small seq2seq-style shape implied by the module: batch=2, seq=8, hidden=32.
    x_small = jax.random.normal(k1, (2, 8, 32), dtype=jnp.float32)
    y_small = seq2seq_t5_forward(x_small)
    jax.block_until_ready(y_small)
    assert y_small.shape == x_small.shape and y_small.dtype == x_small.dtype
    assert bool(jnp.all(y_small == x_small))

    # Larger activation to exercise the lane-dense tiled path (>= 2 grid steps).
    x_large = jax.random.normal(k2, (4, 256, 512), dtype=jnp.float32)
    y_large = seq2seq_t5_forward(x_large)
    jax.block_until_ready(y_large)
    assert y_large.shape == x_large.shape and y_large.dtype == x_large.dtype
    assert bool(jnp.all(y_large == x_large))

    # Lane-misaligned, > 64 KiB input to exercise the padded tiled path.
    x_odd = jax.random.normal(k3, (257, 129), dtype=jnp.float32)
    y_odd = seq2seq_t5_forward(x_odd)
    jax.block_until_ready(y_odd)
    assert y_odd.shape == x_odd.shape and y_odd.dtype == x_odd.dtype
    assert bool(jnp.all(y_odd == x_odd))

    print("KERNEL_OK")
</pallas_src>

<mosaic_0001>
module attributes {stable_mosaic.version = 11 : i64} {
  func.func @_copy_kernel(%arg0: memref<2x8x32xf32, #tpu.memory_space<vmem>>, %arg1: memref<2x8x32xf32, #tpu.memory_space<vmem>>) attributes {dimension_semantics = [], scalar_prefetch = 0 : i64, scratch_operands = 0 : i64, tpu.core_type = #tpu.core_type<tc>} {
    %c0 = arith.constant 0 : index
    %c0_0 = arith.constant 0 : index
    %c0_1 = arith.constant 0 : index
    %0 = vector.load %arg0[%c0, %c0_0, %c0_1] : memref<2x8x32xf32, #tpu.memory_space<vmem>>, vector<2x8x32xf32>
    %c0_2 = arith.constant 0 : index
    %c0_3 = arith.constant 0 : index
    %c0_4 = arith.constant 0 : index
    %1 = vector.load %arg1[%c0_2, %c0_3, %c0_4] : memref<2x8x32xf32, #tpu.memory_space<vmem>>, vector<2x8x32xf32>
    tpu.vector_store %arg1[%c0_2, %c0_3, %c0_4], %0 {strides = array<i32>} : memref<2x8x32xf32, #tpu.memory_space<vmem>>, vector<2x8x32xf32>,
    return
  }
}

</mosaic_0001>

<llo_original>
// kernel: tpu_custom_call.1
$region0: #{tpu_custom_call.1}
  #allocation0 [shape = 'u32[]', space=smem, size = 0x4, offset = 0x4, fixed_abs, tag = 'smem constant byte address 0x4 - core index']
  #allocation1 [shape = 'u32[72,128]{1,0:T(1,128)}', space=vmem, size = 0x9000, scoped, tag = 'internal scratch']
  %s0 = inlined_call_operand.hbm [shape: f32[2,8,32], index: 0, kind: input, shape index: {}, may-alias: {0,1}]
  %s1 = inlined_call_operand.hbm [shape: f32[2,8,32], index: 1, kind: output, shape index: {}, may-alias: {0,1}]
  %s2 = sld [smem:[#allocation0]]
  $region18: #{tpu_custom_call.1} parent=0
    _
  %s4 = ssub.s32 1, %s2
  %s5 = scalar_select 0, %s4, %s2
  $region1: #{tpu_custom_call.1} parent=0
    #allocation2 [shape = 'u8[8192]{0}', space=vmem, size = 0x2000, scoped, tag = 'input window, operand 0, single buffered']
    #allocation3 [shape = 's32[1]{0}', space=sflag, size = 0x4, scoped, tag = 'scoped memory for tpu_custom_call.1']
    #allocation4 [shape = 's32[1]{0}', space=sflag, size = 0x4, scoped, tag = 'scoped memory for tpu_custom_call.1']
    #allocation5 [shape = 'u8[8192]{0}', space=vmem, size = 0x2000, scoped, tag = 'output window, operand 0, single buffered']
    %6 = vsyncpa [#allocation3], 0
    %7 = vsyncpa [#allocation4], 0
    // Predicated region
    $region2: #{tpu_custom_call.1} parent=1 // pred_check
      _
    $region3: #{tpu_custom_call.1} parent=1 // pred_check_branch
      %9 = sbr.rel (0) target = $region5
    $region4: #{tpu_custom_call.1} parent=1 // pred_region
      %11 = vsyncadd [#allocation3], 0
      %s12 = sshll.u32 %s0, 4
      %s13 = int_to_ptr.hbm [resolvable:$true] %s12
      %s14 = sshll.u32 [#allocation2], 4
      %s15 = int_to_ptr.vmem [resolvable:$true] %s14
      %20 = dma.hbm_to_vmem [thread:$0]  %s13, 256, %s15, [#allocation3], 128, 128, 8
    $region5: #{tpu_custom_call.1} parent=1 // pred_fallthru
      _
    // Predicated region
    $region6: #{tpu_custom_call.1} parent=1 // pred_check
      _
    $region7: #{tpu_custom_call.1} parent=1 // pred_check_branch
      %22 = sbr.rel (0) target = $region9
    $region8: #{tpu_custom_call.1} parent=1 // pred_region
      %24 = dma.done [#allocation3], 256
    $region9: #{tpu_custom_call.1} parent=1 // pred_fallthru
      _
    %v25 = vld [vmem:[#allocation2] sm:$0xff]
    %v26 = vld [vmem:[#allocation2 + $0x8] sm:$0xff]
    %vm27 = vcmask 261120
    %28 = vst.msk [vmem:[#allocation5] sm:$0xff] %vm27, %v25
    %29 = vst.msk [vmem:[#allocation5 + $0x8] sm:$0xff] %vm27, %v26
    // Predicated region
    $region10: #{tpu_custom_call.1} parent=1 // pred_check
      _
    $region11: #{tpu_custom_call.1} parent=1 // pred_check_branch
      %31 = sbr.rel (0) target = $region13
    $region12: #{tpu_custom_call.1} parent=1 // pred_region
      %33 = vsyncadd [#allocation4], 0
      %s34 = sshll.u32 [#allocation5], 4
      %s35 = int_to_ptr.vmem [resolvable:$true] %s34
      %s36 = sshll.u32 %s1, 4
      %s37 = int_to_ptr.hbm [resolvable:$true] %s36
      %42 = dma.vmem_to_hbm [thread:$0]  %s35, 256, %s37, [#allocation4], 128, 128, 8
    $region13: #{tpu_custom_call.1} parent=1 // pred_fallthru
      _
    // Predicated region
    $region14: #{tpu_custom_call.1} parent=1 // pred_check
      _
    $region15: #{tpu_custom_call.1} parent=1 // pred_check_branch
      %44 = sbr.rel (0) target = $region17
    $region16: #{tpu_custom_call.1} parent=1 // pred_region
      %46 = dma.done [#allocation4], 256
    $region17: #{tpu_custom_call.1} parent=1 // pred_fallthru
      _
    %47 = vsyncpa [#allocation3], 1
    %48 = vsyncpa [#allocation4], 1

</llo_original>
